<compile_context>
chip_gen: v7x
topology: tpu7x:2x2x1
jax: 0.10.0
libtpu: 0.0.40
codegen_flags: <defaults>
</compile_context>

<pallas_src>
import jax
import jax.numpy as jnp
from jax.experimental import pallas as pl
from jax.experimental.pallas import tpu as pltpu

_TARGET_BLOCK_BYTES = 2 * 1024 * 1024   # ~2 MiB per block; 4 live buffers ~8 MiB
_VMEM_LIMIT_BYTES = 32 * 1024 * 1024    # explicit, safe on v5e/v6e/v7x


def _copy_kernel(x_ref, o_ref):
    # Identity copy of the current tile (the only compute unsqueeze implies).
    o_ref[...] = x_ref[...]


def _lane_dense_view(x):
    """Reshape x to a (rows, C) view with C a large multiple of 128 if possible."""
    t = x.size
    if t == 0:
        return None
    best = None
    for c in (2048, 1024, 512, 256, 128):
        if t % c == 0:
            if best is None:
                best = c
            if t // c >= 8:                # prefer >= 8 rows for full (8,128) tiles
                return x.reshape(t // c, c)
    if best is not None:
        return x.reshape(t // best, best)
    return None                            # element count not 128-divisible


def _pallas_copy_2d(x2d):
    """Tiled identity copy of a 2D array through VMEM."""
    r, c = x2d.shape
    itemsize = jnp.dtype(x2d.dtype).itemsize
    # Sublane packing: 8 rows (32-bit), 16 (bf16/fp16), 32 (int8/fp8).
    pack = 8 * max(1, 4 // max(1, itemsize))

    # Row tile targeting ~_TARGET_BLOCK_BYTES, rounded to the packing multiple.
    target_rows = max(1, _TARGET_BLOCK_BYTES // max(1, c * itemsize))
    tr = (target_rows // pack) * pack
    if tr == 0:
        tr = pack
    tr = min(tr, r)
    # Block's second-last dim must be a multiple of 8 or the full extent.
    if tr < r and tr % 8 != 0:
        tr = r

    grid = (pl.cdiv(r, tr),)
    return pl.pallas_call(
        _copy_kernel,
        out_shape=jax.ShapeDtypeStruct((r, c), x2d.dtype),
        grid_spec=pltpu.PrefetchScalarGridSpec(
            num_scalar_prefetch=0,
            grid=grid,
            in_specs=[pl.BlockSpec((tr, c), lambda i: (i, 0))],
            out_specs=pl.BlockSpec((tr, c), lambda i: (i, 0)),
        ),
        compiler_params=pltpu.CompilerParams(
            dimension_semantics=("parallel",),
            vmem_limit_bytes=_VMEM_LIMIT_BYTES,
        ),
    )(x2d)


def unsqueeze(x, dim):
    """Pallas-backed equivalent of torch.unsqueeze(x, dim)."""
    ndim = x.ndim
    # torch semantics: dim in [-ndim-1, ndim], negative dims wrap.
    if not (-ndim - 1 <= dim <= ndim):
        raise ValueError(f"dim {dim} out of range for ndim {ndim}")
    if dim < 0:
        dim = dim + ndim + 1
    out_shape = x.shape[:dim] + (1,) + x.shape[dim:]

    if ndim == 0 or x.size == 0:
        # TODO(synk): scalar / zero-sized inputs have no tileable copy; pure reshape.
        return x.reshape(out_shape)

    # Lane-dense re-factorization of the flat element stream (memcpy does not
    # care about the original 2D factorization; pick the one the DMA/VPU likes).
    x2d = _lane_dense_view(x)
    if x2d is None:
        # Odd element counts: fall back to (rows, last_dim); last dim is the
        # full extent so the block layout stays legal.
        x2d = x.reshape(-1, x.shape[-1])

    y2d = _pallas_copy_2d(x2d)
    # Zero-cost metadata step: row-major order is preserved by both reshapes.
    return y2d.reshape(out_shape)


if __name__ == "__main__":
    key = jax.random.PRNGKey(0)
    x = jax.random.normal(key, (2, 4, 16, 16), dtype=jnp.float32)

    dim = 1  # Unsqueeze(dim=1): (2, 4, 16, 16) -> (2, 1, 4, 16, 16)
    y = unsqueeze(x, dim)
    jax.block_until_ready(y)

    # Reference check against jnp.expand_dims (same semantics as torch.unsqueeze).
    ref = jnp.expand_dims(x, dim)
    assert y.shape == (2, 1, 4, 16, 16), y.shape
    assert y.dtype == x.dtype
    assert jnp.array_equal(y, ref)

    # Negative dim, as torch allows.
    y_neg = unsqueeze(x, -1)
    jax.block_until_ready(y_neg)
    assert y_neg.shape == (2, 4, 16, 16, 1)
    assert jnp.array_equal(y_neg, jnp.expand_dims(x, -1))

    # bf16 input exercises the dtype-aware sublane packing path.
    xb = x.astype(jnp.bfloat16)
    yb = unsqueeze(xb, 0)
    jax.block_until_ready(yb)
    assert yb.shape == (1, 2, 4, 16, 16)
    assert jnp.array_equal(yb, jnp.expand_dims(xb, 0))

    # Odd element count exercises the non-128-divisible fallback tiling.
    xo = jax.random.normal(jax.random.PRNGKey(1), (3, 5, 7), dtype=jnp.float32)
    yo = unsqueeze(xo, 2)
    jax.block_until_ready(yo)
    assert yo.shape == (3, 5, 1, 7)
    assert jnp.array_equal(yo, jnp.expand_dims(xo, 2))

    print("KERNEL_OK")
</pallas_src>

<mosaic_0001>
module attributes {stable_mosaic.version = 11 : i64} {
  func.func @_copy_kernel(%arg0: i32, %arg1: memref<8x256xf32, #tpu.memory_space<vmem>>, %arg2: memref<8x256xf32, #tpu.memory_space<vmem>>) attributes {dimension_semantics = [#tpu.dimension_semantics<parallel>], iteration_bounds = array<i64: 1>, scalar_prefetch = 0 : i64, scratch_operands = 0 : i64, tpu.core_type = #tpu.core_type<tc>, window_params = [{transform_indices = @transform_0, window_bounds = array<i64: 8, 256>}, {transform_indices = @transform_1, window_bounds = array<i64: 8, 256>}]} {
    %c0 = arith.constant 0 : index
    %c0_0 = arith.constant 0 : index
    %0 = vector.load %arg1[%c0, %c0_0] : memref<8x256xf32, #tpu.memory_space<vmem>>, vector<8x256xf32>
    %c0_1 = arith.constant 0 : index
    %c0_2 = arith.constant 0 : index
    %1 = vector.load %arg2[%c0_1, %c0_2] : memref<8x256xf32, #tpu.memory_space<vmem>>, vector<8x256xf32>
    tpu.vector_store %arg2[%c0_1, %c0_2], %0 {strides = array<i32>} : memref<8x256xf32, #tpu.memory_space<vmem>>, vector<8x256xf32>,
    return
  }
  func.func @transform_0(%arg0: i32) -> (i32, i32) {
    %c0_i32 = arith.constant 0 : i32
    %c0_i32_0 = arith.constant 0 : i32
    return %arg0, %c0_i32 : i32, i32
  }
  func.func @transform_1(%arg0: i32) -> (i32, i32) {
    %c0_i32 = arith.constant 0 : i32
    %c0_i32_0 = arith.constant 0 : i32
    return %arg0, %c0_i32 : i32, i32
  }
}

</mosaic_0001>

<llo_original>
// kernel: tpu_custom_call.1
$region0: #{tpu_custom_call.1}
  #allocation0 [shape = 'u32[]', space=smem, size = 0x4, offset = 0x4, fixed_abs, tag = 'smem constant byte address 0x4 - core index']
  #allocation1 [shape = 'u32[144,128]{1,0:T(1,128)}', space=vmem, size = 0x12000, scoped, tag = 'internal scratch']
  %s0 = inlined_call_operand.hbm [shape: f32[8,256], index: 0, kind: input, shape index: {}]
  %s1 = inlined_call_operand.hbm [shape: f32[8,256], index: 1, kind: output, shape index: {}]
  %s2 = sld [smem:[#allocation0]]
  $region18: #{tpu_custom_call.1} parent=0
    _
  %s4 = ssub.s32 1, %s2
  %s5 = scalar_select 0, %s4, %s2
  $region1: #{tpu_custom_call.1} parent=0
    #allocation2 [shape = 'u8[8192]{0}', space=vmem, size = 0x2000, scoped, tag = 'input window, operand 0, single buffered']
    #allocation3 [shape = 's32[1]{0}', space=sflag, size = 0x4, scoped, tag = 'scoped memory for tpu_custom_call.1']
    #allocation4 [shape = 's32[1]{0}', space=sflag, size = 0x4, scoped, tag = 'scoped memory for tpu_custom_call.1']
    #allocation5 [shape = 'u8[8192]{0}', space=vmem, size = 0x2000, scoped, tag = 'output window, operand 0, single buffered']
    %6 = vsyncpa [#allocation3], 0
    %7 = vsyncpa [#allocation4], 0
    // Predicated region
    $region2: #{tpu_custom_call.1} parent=1 // pred_check
      _
    $region3: #{tpu_custom_call.1} parent=1 // pred_check_branch
      %9 = sbr.rel (0) target = $region5
    $region4: #{tpu_custom_call.1} parent=1 // pred_region
      %s11 = ssub.s32 256, 256
      %12 = vsyncadd [#allocation3], %s11
      %s14 = sshll.u32 [#allocation2], 4
      %s15 = int_to_ptr.vmem [resolvable:$true] %s14
      %17 = dma.hbm_to_vmem [thread:$0]  %s0, 256, %s15, [#allocation3]
    $region5: #{tpu_custom_call.1} parent=1 // pred_fallthru
      _
    // Predicated region
    $region6: #{tpu_custom_call.1} parent=1 // pred_check
      _
    $region7: #{tpu_custom_call.1} parent=1 // pred_check_branch
      %19 = sbr.rel (0) target = $region9
    $region8: #{tpu_custom_call.1} parent=1 // pred_region
      %20 = dma.done [#allocation3], 256
    $region9: #{tpu_custom_call.1} parent=1 // pred_fallthru
      _
    %v21 = vld [vmem:[#allocation2] sm:$0xff]
    %v22 = vld [vmem:[#allocation2 + $0x8] sm:$0xff]
    %23 = vst [vmem:[#allocation5] sm:$0xff] %v21
    %24 = vst [vmem:[#allocation5 + $0x8] sm:$0xff] %v22
    // Predicated region
    $region10: #{tpu_custom_call.1} parent=1 // pred_check
      _
    $region11: #{tpu_custom_call.1} parent=1 // pred_check_branch
      %26 = sbr.rel (0) target = $region13
    $region12: #{tpu_custom_call.1} parent=1 // pred_region
      %s28 = ssub.s32 256, 256
      %29 = vsyncadd [#allocation4], %s28
      %s31 = sshll.u32 [#allocation5], 4
      %s32 = int_to_ptr.vmem [resolvable:$true] %s31
      %34 = dma.vmem_to_hbm [thread:$0]  %s32, 256, %s1, [#allocation4]
    $region13: #{tpu_custom_call.1} parent=1 // pred_fallthru
      _
    // Predicated region
    $region14: #{tpu_custom_call.1} parent=1 // pred_check
      _
    $region15: #{tpu_custom_call.1} parent=1 // pred_check_branch
      %36 = sbr.rel (0) target = $region17
    $region16: #{tpu_custom_call.1} parent=1 // pred_region
      %37 = dma.done [#allocation4], 256
    $region17: #{tpu_custom_call.1} parent=1 // pred_fallthru
      _
    %38 = vsyncpa [#allocation3], 1
    %39 = vsyncpa [#allocation4], 1

</llo_original>
